<compile_context>
chip_gen: v7x
topology: tpu7x:2x2x1
jax: 0.10.0
libtpu: 0.0.40
codegen_flags: <defaults>
</compile_context>

<pallas_src>
import jax
import jax.numpy as jnp
from jax import lax
from jax.experimental import pallas as pl
from jax.experimental.pallas import tpu as pltpu

MODEL_DIM = 32                       # model_dim
NUM_HEADS = 4                        # num_heads
DIM_PER_HEAD = MODEL_DIM // NUM_HEADS
SEQ = 8                              # sequence length
LN_EPS = 1e-5                        # nn.LayerNorm default eps
# PyTorch: scale = (key.size(-1) // num_heads) ** (-0.5) with key.size(-1) == dim_per_head.
# Kept exactly as the module defines it (== 2 ** -0.5 for this config).
SCALE = float((DIM_PER_HEAD // NUM_HEADS) ** (-0.5))

# log2 shifts for building the block-diagonal head masks with iota compares
# (avoids vector integer division in the kernel).
_SHIFT_D = DIM_PER_HEAD.bit_length() - 1
_SHIFT_N = SEQ.bit_length() - 1
assert (1 << _SHIFT_D) == DIM_PER_HEAD and (1 << _SHIFT_N) == SEQ


def mha_kernel(x_ref, w_ref, b_ref, out_ref, attn_ref):
    D, H, N = MODEL_DIM, NUM_HEADS, SEQ

    x = x_ref[...]                         # (N, 3D) = [xk | xv | xq]
    w_qkv = w_ref[0:3 * D, :]              # (3D, 3D) block-diag [wk ; wv ; wq*scale]
    w_f = w_ref[3 * D:3 * D + D, 0:D]      # (D, D)   final linear
    b_qkv = b_ref[0:1, :]                  # (1, 3D)  [bk | bv | bq*scale]
    b_f = b_ref[1:2, 0:D]                  # (1, D)
    gamma = b_ref[2:3, 0:D]                # (1, D)
    beta = b_ref[3:4, 0:D]                 # (1, D)

    # Fused K/V/Q projection: one (N,3D)x(3D,3D) MXU matmul.
    qkv = jnp.dot(x, w_qkv, preferred_element_type=jnp.float32) + b_qkv
    k = qkv[:, 0:D]
    v = qkv[:, D:2 * D]
    q = qkv[:, 2 * D:3 * D]                # softmax scale already folded in
    residual = x[:, 2 * D:3 * D]           # query before projection

    # All-head scores in ONE matmul: S[n, h*N + j] = q_h[n] . k_h[j].
    # Build block-diagonal K^T (D, H*N): one transpose + lane concat + iota mask.
    kt_tiled = jnp.concatenate([k.T] * H, axis=1)                 # (D, H*N)
    r_i = lax.broadcasted_iota(jnp.int32, (D, H * N), 0)
    c_i = lax.broadcasted_iota(jnp.int32, (D, H * N), 1)
    kt_bd = jnp.where((r_i >> _SHIFT_D) == (c_i >> _SHIFT_N), kt_tiled, 0.0)
    s = jnp.dot(q, kt_bd, preferred_element_type=jnp.float32)     # (N, H*N)

    # Per-head softmax over each N-lane block (exact per-(row, head) max;
    # only cheap static lane slices, all matmul work stays fused above).
    p_parts = []
    for h in range(H):
        sh = s[:, h * N:(h + 1) * N]                              # (N, N)
        eh = jnp.exp(sh - jnp.max(sh, axis=-1, keepdims=True))
        inv = pl.reciprocal(jnp.sum(eh, axis=-1, keepdims=True), approx=True)
        p_parts.append(eh * inv)
    p = jnp.concatenate(p_parts, axis=-1)                         # (N, H*N) lane-packed
    attn_ref[...] = p                                             # single lane-dense store

    # Context in ONE matmul with a block-diagonal V (H*N, D).
    v_tiled = jnp.concatenate([v] * H, axis=0)                    # (H*N, D)
    r_j = lax.broadcasted_iota(jnp.int32, (H * N, D), 0)
    c_j = lax.broadcasted_iota(jnp.int32, (H * N, D), 1)
    v_bd = jnp.where((r_j >> _SHIFT_N) == (c_j >> _SHIFT_D), v_tiled, 0.0)
    ctx = jnp.dot(p, v_bd, preferred_element_type=jnp.float32)    # (N, D)

    # Final linear, residual add, LayerNorm (dropout p=0.0 -> identity).
    o = jnp.dot(ctx, w_f, preferred_element_type=jnp.float32) + b_f
    y = residual + o
    mu = jnp.mean(y, axis=-1, keepdims=True)
    var = jnp.mean((y - mu) ** 2, axis=-1, keepdims=True)
    out_ref[...] = gamma * (y - mu) * lax.rsqrt(var + LN_EPS) + beta


def pack_operands(xk, xv, xq, params):
    """Host-side packing: 3 DMA slabs instead of 13 separate tiny inputs."""
    wk, bk, wv, bv, wq, bq, wf, bf, gamma, beta = params
    D = MODEL_DIM
    x_cat = jnp.concatenate([xk, xv, xq], axis=-1)                       # (SEQ, 3D)

    z = jnp.zeros((D, D), jnp.float32)
    w_qkv = jnp.block([[wk, z, z],
                       [z, wv, z],
                       [z, z, wq * SCALE]])                              # (3D, 3D)
    w_slab = jnp.zeros((4 * D, 3 * D), jnp.float32)                      # (128, 96)
    w_slab = w_slab.at[0:3 * D, :].set(w_qkv)
    w_slab = w_slab.at[3 * D:4 * D, 0:D].set(wf)

    b_slab = jnp.zeros((4, 3 * D), jnp.float32)                          # (4, 96)
    b_slab = b_slab.at[0, :].set(jnp.concatenate([bk, bv, bq * SCALE], axis=-1)[0])
    b_slab = b_slab.at[1, 0:D].set(bf[0])
    b_slab = b_slab.at[2, 0:D].set(gamma[0])
    b_slab = b_slab.at[3, 0:D].set(beta[0])
    return x_cat, w_slab, b_slab


def multi_head_attention(xk, xv, xq, params):
    x_cat, w_slab, b_slab = pack_operands(xk, xv, xq, params)
    vmem = lambda: pl.BlockSpec(memory_space=pltpu.MemorySpace.VMEM)
    out, attn_packed = pl.pallas_call(
        mha_kernel,
        out_shape=(
            jax.ShapeDtypeStruct((SEQ, MODEL_DIM), jnp.float32),          # output.squeeze()
            jax.ShapeDtypeStruct((SEQ, NUM_HEADS * SEQ), jnp.float32),    # packed attention
        ),
        in_specs=[vmem(), vmem(), vmem()],
        out_specs=(vmem(), vmem()),
    )(x_cat, w_slab, b_slab)
    # (SEQ, H*SEQ) -> (H, SEQ, SEQ) == attention.squeeze()
    attn = attn_packed.reshape(SEQ, NUM_HEADS, SEQ).transpose(1, 0, 2)
    return out, attn


def make_params(key):
    ks = jax.random.split(key, 4)

    def linear(k):
        w = 0.02 * jax.random.normal(k, (MODEL_DIM, MODEL_DIM), jnp.float32)  # (in, out)
        b = 0.01 * jax.random.normal(jax.random.fold_in(k, 1), (1, MODEL_DIM), jnp.float32)
        return w, b

    wk, bk = linear(ks[0])
    wv, bv = linear(ks[1])
    wq, bq = linear(ks[2])
    wf, bf = linear(ks[3])
    gamma = jnp.ones((1, MODEL_DIM), jnp.float32)
    beta = jnp.zeros((1, MODEL_DIM), jnp.float32)
    return (wk, bk, wv, bv, wq, bq, wf, bf, gamma, beta)


def reference(xk, xv, xq, params):
    """Pure-JAX reference mirroring the PyTorch forward (v2, dropout=0)."""
    wk, bk, wv, bv, wq, bq, wf, bf, gamma, beta = params
    k = xk @ wk + bk
    v = xv @ wv + bv
    q = xq @ wq + bq
    kh = k.reshape(SEQ, NUM_HEADS, DIM_PER_HEAD).transpose(1, 0, 2)
    vh = v.reshape(SEQ, NUM_HEADS, DIM_PER_HEAD).transpose(1, 0, 2)
    qh = q.reshape(SEQ, NUM_HEADS, DIM_PER_HEAD).transpose(1, 0, 2)
    s = jnp.einsum('hnd,hmd->hnm', qh, kh) * SCALE
    attn = jax.nn.softmax(s, axis=2)
    ctx = jnp.einsum('hnm,hmd->hnd', attn, vh)
    ctx = ctx.transpose(1, 0, 2).reshape(SEQ, MODEL_DIM)
    o = ctx @ wf + bf
    y = xq + o
    mu = jnp.mean(y, axis=-1, keepdims=True)
    var = jnp.mean((y - mu) ** 2, axis=-1, keepdims=True)
    out = gamma * (y - mu) / jnp.sqrt(var + LN_EPS) + beta
    return out, attn


if __name__ == "__main__":
    root = jax.random.PRNGKey(0)
    k_in, k_par = jax.random.split(root)
    kk, kv, kq = jax.random.split(k_in, 3)
    key_in = jax.random.normal(kk, (SEQ, MODEL_DIM), jnp.float32)
    value_in = jax.random.normal(kv, (SEQ, MODEL_DIM), jnp.float32)
    query_in = jax.random.normal(kq, (SEQ, MODEL_DIM), jnp.float32)
    params = make_params(k_par)

    out, attn = jax.jit(multi_head_attention)(key_in, value_in, query_in, params)
    out = jax.block_until_ready(out)
    attn = jax.block_until_ready(attn)

    out_ref, attn_ref = reference(key_in, value_in, query_in, params)
    assert out.shape == (SEQ, MODEL_DIM) and attn.shape == (NUM_HEADS, SEQ, SEQ)
    # pl.reciprocal(approx=True) in the softmax is ~1e-3-accurate -> looser tolerance.
    assert jnp.allclose(attn, attn_ref, atol=5e-3, rtol=5e-3), "attention mismatch"
    assert jnp.allclose(out, out_ref, atol=2e-3, rtol=2e-3), "output mismatch"

    print("KERNEL_OK")
</pallas_src>

<mosaic_0001>
module attributes {stable_mosaic.version = 11 : i64} {
  func.func @mha_kernel(%arg0: memref<8x96xf32, #tpu.memory_space<vmem>>, %arg1: memref<128x96xf32, #tpu.memory_space<vmem>>, %arg2: memref<4x96xf32, #tpu.memory_space<vmem>>, %arg3: memref<8x32xf32, #tpu.memory_space<vmem>>, %arg4: memref<8x32xf32, #tpu.memory_space<vmem>>) attributes {dimension_semantics = [], scalar_prefetch = 0 : i64, scratch_operands = 0 : i64, tpu.core_type = #tpu.core_type<tc>} {
    %c0 = arith.constant 0 : index
    %c0_0 = arith.constant 0 : index
    %0 = vector.load %arg0[%c0, %c0_0] : memref<8x96xf32, #tpu.memory_space<vmem>>, vector<8x96xf32>
    %c0_1 = arith.constant 0 : index
    %c0_2 = arith.constant 0 : index
    %1 = vector.load %arg1[%c0_1, %c0_2] : memref<128x96xf32, #tpu.memory_space<vmem>>, vector<96x96xf32>
    %c96 = arith.constant 96 : index
    %c0_3 = arith.constant 0 : index
    %2 = vector.load %arg1[%c96, %c0_3] : memref<128x96xf32, #tpu.memory_space<vmem>>, vector<32x32xf32>
    %c0_4 = arith.constant 0 : index
    %c0_5 = arith.constant 0 : index
    %3 = vector.load %arg2[%c0_4, %c0_5] : memref<4x96xf32, #tpu.memory_space<vmem>>, vector<1x96xf32>
    %c1 = arith.constant 1 : index
    %c0_6 = arith.constant 0 : index
    %4 = vector.load %arg2[%c1, %c0_6] : memref<4x96xf32, #tpu.memory_space<vmem>>, vector<1x32xf32>
    %c2 = arith.constant 2 : index
    %c0_7 = arith.constant 0 : index
    %5 = vector.load %arg2[%c2, %c0_7] : memref<4x96xf32, #tpu.memory_space<vmem>>, vector<1x32xf32>
    %c3 = arith.constant 3 : index
    %c0_8 = arith.constant 0 : index
    %6 = vector.load %arg2[%c3, %c0_8] : memref<4x96xf32, #tpu.memory_space<vmem>>, vector<1x32xf32>
    %cst = arith.constant dense<0.000000e+00> : vector<8x96xf32>
    %7 = tpu.matmul %0, %1, %cst {dimension_numbers = #tpu.dot_dimension_numbers<[1], [0], [0], [1], [0, 0, 1, 1], [], []>} : vector<8x96xf32>, vector<96x96xf32>, vector<8x96xf32> -> vector<8x96xf32>
    %8 = vector.broadcast %3 : vector<1x96xf32> to vector<8x96xf32>
    %9 = arith.addf %7, %8 : vector<8x96xf32>
    %10 = vector.extract_strided_slice %9 {offsets = [0, 0], sizes = [8, 32], strides = [1, 1]} : vector<8x96xf32> to vector<8x32xf32>
    %11 = vector.extract_strided_slice %9 {offsets = [0, 32], sizes = [8, 32], strides = [1, 1]} : vector<8x96xf32> to vector<8x32xf32>
    %12 = vector.extract_strided_slice %9 {offsets = [0, 64], sizes = [8, 32], strides = [1, 1]} : vector<8x96xf32> to vector<8x32xf32>
    %13 = vector.extract_strided_slice %0 {offsets = [0, 64], sizes = [8, 32], strides = [1, 1]} : vector<8x96xf32> to vector<8x32xf32>
    %14 = tpu.transpose %10, [1, 0] : vector<8x32xf32> -> vector<32x8xf32>
    %15 = tpu.concatenate %14, %14, %14, %14 in 1 : vector<32x8xf32>, vector<32x8xf32>, vector<32x8xf32>, vector<32x8xf32> -> vector<32x32xf32>
    %16 = tpu.iota {dimensions = array<i32: 0>} : vector<32x32xi32>
    %17 = tpu.iota {dimensions = array<i32: 1>} : vector<32x32xi32>
    %c3_i32 = arith.constant 3 : i32
    %18 = vector.broadcast %c3_i32 : i32 to vector<32x32xi32>
    %19 = arith.shrsi %16, %18 : vector<32x32xi32>
    %c3_i32_9 = arith.constant 3 : i32
    %20 = vector.broadcast %c3_i32_9 : i32 to vector<32x32xi32>
    %21 = arith.shrsi %17, %20 : vector<32x32xi32>
    %22 = arith.cmpi eq, %19, %21 : vector<32x32xi32>
    %cst_10 = arith.constant 0.000000e+00 : f32
    %23 = vector.broadcast %cst_10 : f32 to vector<32x32xf32>
    %24 = arith.select %22, %15, %23 : vector<32x32xi1>, vector<32x32xf32>
    %cst_11 = arith.constant dense<0.000000e+00> : vector<8x32xf32>
    %25 = tpu.matmul %12, %24, %cst_11 {dimension_numbers = #tpu.dot_dimension_numbers<[1], [0], [0], [1], [0, 0, 1, 1], [], []>} : vector<8x32xf32>, vector<32x32xf32>, vector<8x32xf32> -> vector<8x32xf32>
    %26 = vector.extract_strided_slice %25 {offsets = [0, 0], sizes = [8, 8], strides = [1, 1]} : vector<8x32xf32> to vector<8x8xf32>
    %cst_12 = arith.constant dense<0xFF800000> : vector<8xf32>
    %27 = vector.multi_reduction <maximumf>, %26, %cst_12 [1] : vector<8x8xf32> to vector<8xf32>
    %28 = vector.shape_cast %27 : vector<8xf32> to vector<8x1xf32>
    %29 = vector.broadcast %28 : vector<8x1xf32> to vector<8x8xf32>
    %30 = arith.subf %26, %29 : vector<8x8xf32>
    %31 = math.exp %30 : vector<8x8xf32>
    %cst_13 = arith.constant dense<0.000000e+00> : vector<8xf32>
    %32 = vector.multi_reduction <add>, %31, %cst_13 [1] : vector<8x8xf32> to vector<8xf32>
    %33 = vector.shape_cast %32 : vector<8xf32> to vector<8x1xf32>
    %34 = tpu.reciprocal %33 {approx = true} : vector<8x1xf32> -> vector<8x1xf32>
    %35 = vector.broadcast %34 : vector<8x1xf32> to vector<8x8xf32>
    %36 = arith.mulf %31, %35 : vector<8x8xf32>
    %37 = vector.extract_strided_slice %25 {offsets = [0, 8], sizes = [8, 8], strides = [1, 1]} : vector<8x32xf32> to vector<8x8xf32>
    %cst_14 = arith.constant dense<0xFF800000> : vector<8xf32>
    %38 = vector.multi_reduction <maximumf>, %37, %cst_14 [1] : vector<8x8xf32> to vector<8xf32>
    %39 = vector.shape_cast %38 : vector<8xf32> to vector<8x1xf32>
    %40 = vector.broadcast %39 : vector<8x1xf32> to vector<8x8xf32>
    %41 = arith.subf %37, %40 : vector<8x8xf32>
    %42 = math.exp %41 : vector<8x8xf32>
    %cst_15 = arith.constant dense<0.000000e+00> : vector<8xf32>
    %43 = vector.multi_reduction <add>, %42, %cst_15 [1] : vector<8x8xf32> to vector<8xf32>
    %44 = vector.shape_cast %43 : vector<8xf32> to vector<8x1xf32>
    %45 = tpu.reciprocal %44 {approx = true} : vector<8x1xf32> -> vector<8x1xf32>
    %46 = vector.broadcast %45 : vector<8x1xf32> to vector<8x8xf32>
    %47 = arith.mulf %42, %46 : vector<8x8xf32>
    %48 = vector.extract_strided_slice %25 {offsets = [0, 16], sizes = [8, 8], strides = [1, 1]} : vector<8x32xf32> to vector<8x8xf32>
    %cst_16 = arith.constant dense<0xFF800000> : vector<8xf32>
    %49 = vector.multi_reduction <maximumf>, %48, %cst_16 [1] : vector<8x8xf32> to vector<8xf32>
    %50 = vector.shape_cast %49 : vector<8xf32> to vector<8x1xf32>
    %51 = vector.broadcast %50 : vector<8x1xf32> to vector<8x8xf32>
    %52 = arith.subf %48, %51 : vector<8x8xf32>
    %53 = math.exp %52 : vector<8x8xf32>
    %cst_17 = arith.constant dense<0.000000e+00> : vector<8xf32>
    %54 = vector.multi_reduction <add>, %53, %cst_17 [1] : vector<8x8xf32> to vector<8xf32>
    %55 = vector.shape_cast %54 : vector<8xf32> to vector<8x1xf32>
    %56 = tpu.reciprocal %55 {approx = true} : vector<8x1xf32> -> vector<8x1xf32>
    %57 = vector.broadcast %56 : vector<8x1xf32> to vector<8x8xf32>
    %58 = arith.mulf %53, %57 : vector<8x8xf32>
    %59 = vector.extract_strided_slice %25 {offsets = [0, 24], sizes = [8, 8], strides = [1, 1]} : vector<8x32xf32> to vector<8x8xf32>
    %cst_18 = arith.constant dense<0xFF800000> : vector<8xf32>
    %60 = vector.multi_reduction <maximumf>, %59, %cst_18 [1] : vector<8x8xf32> to vector<8xf32>
    %61 = vector.shape_cast %60 : vector<8xf32> to vector<8x1xf32>
    %62 = vector.broadcast %61 : vector<8x1xf32> to vector<8x8xf32>
    %63 = arith.subf %59, %62 : vector<8x8xf32>
    %64 = math.exp %63 : vector<8x8xf32>
    %cst_19 = arith.constant dense<0.000000e+00> : vector<8xf32>
    %65 = vector.multi_reduction <add>, %64, %cst_19 [1] : vector<8x8xf32> to vector<8xf32>
    %66 = vector.shape_cast %65 : vector<8xf32> to vector<8x1xf32>
    %67 = tpu.reciprocal %66 {approx = true} : vector<8x1xf32> -> vector<8x1xf32>
    %68 = vector.broadcast %67 : vector<8x1xf32> to vector<8x8xf32>
    %69 = arith.mulf %64, %68 : vector<8x8xf32>
    %70 = tpu.concatenate %36, %47, %58, %69 in 1 : vector<8x8xf32>, vector<8x8xf32>, vector<8x8xf32>, vector<8x8xf32> -> vector<8x32xf32>
    %c0_20 = arith.constant 0 : index
    %c0_21 = arith.constant 0 : index
    %71 = vector.load %arg4[%c0_20, %c0_21] : memref<8x32xf32, #tpu.memory_space<vmem>>, vector<8x32xf32>
    tpu.vector_store %arg4[%c0_20, %c0_21], %70 {strides = array<i32>} : memref<8x32xf32, #tpu.memory_space<vmem>>, vector<8x32xf32>,
    %72 = tpu.concatenate %11, %11, %11, %11 in 0 : vector<8x32xf32>, vector<8x32xf32>, vector<8x32xf32>, vector<8x32xf32> -> vector<32x32xf32>
    %73 = tpu.iota {dimensions = array<i32: 0>} : vector<32x32xi32>
    %74 = tpu.iota {dimensions = array<i32: 1>} : vector<32x32xi32>
    %c3_i32_22 = arith.constant 3 : i32
    %75 = vector.broadcast %c3_i32_22 : i32 to vector<32x32xi32>
    %76 = arith.shrsi %73, %75 : vector<32x32xi32>
    %c3_i32_23 = arith.constant 3 : i32
    %77 = vector.broadcast %c3_i32_23 : i32 to vector<32x32xi32>
    %78 = arith.shrsi %74, %77 : vector<32x32xi32>
    %79 = arith.cmpi eq, %76, %78 : vector<32x32xi32>
    %cst_24 = arith.constant 0.000000e+00 : f32
    %80 = vector.broadcast %cst_24 : f32 to vector<32x32xf32>
    %81 = arith.select %79, %72, %80 : vector<32x32xi1>, vector<32x32xf32>
    %cst_25 = arith.constant dense<0.000000e+00> : vector<8x32xf32>
    %82 = tpu.matmul %70, %81, %cst_25 {dimension_numbers = #tpu.dot_dimension_numbers<[1], [0], [0], [1], [0, 0, 1, 1], [], []>} : vector<8x32xf32>, vector<32x32xf32>, vector<8x32xf32> -> vector<8x32xf32>
    %cst_26 = arith.constant dense<0.000000e+00> : vector<8x32xf32>
    %83 = tpu.matmul %82, %2, %cst_26 {dimension_numbers = #tpu.dot_dimension_numbers<[1], [0], [0], [1], [0, 0, 1, 1], [], []>} : vector<8x32xf32>, vector<32x32xf32>, vector<8x32xf32> -> vector<8x32xf32>
    %84 = vector.broadcast %4 : vector<1x32xf32> to vector<8x32xf32>
    %85 = arith.addf %83, %84 : vector<8x32xf32>
    %86 = arith.addf %13, %85 : vector<8x32xf32>
    %cst_27 = arith.constant dense<0.000000e+00> : vector<8xf32>
    %87 = vector.multi_reduction <add>, %86, %cst_27 [1] : vector<8x32xf32> to vector<8xf32>
    %88 = vector.shape_cast %87 : vector<8xf32> to vector<8x1xf32>
    %cst_28 = arith.constant 3.200000e+01 : f32
    %89 = vector.broadcast %cst_28 : f32 to vector<8x1xf32>
    %90 = arith.divf %88, %89 : vector<8x1xf32>
    %91 = vector.broadcast %90 : vector<8x1xf32> to vector<8x32xf32>
    %92 = arith.subf %86, %91 : vector<8x32xf32>
    %93 = arith.mulf %92, %92 : vector<8x32xf32>
    %cst_29 = arith.constant dense<0.000000e+00> : vector<8xf32>
    %94 = vector.multi_reduction <add>, %93, %cst_29 [1] : vector<8x32xf32> to vector<8xf32>
    %95 = vector.shape_cast %94 : vector<8xf32> to vector<8x1xf32>
    %cst_30 = arith.constant 3.200000e+01 : f32
    %96 = vector.broadcast %cst_30 : f32 to vector<8x1xf32>
    %97 = arith.divf %95, %96 : vector<8x1xf32>
    %98 = vector.broadcast %90 : vector<8x1xf32> to vector<8x32xf32>
    %99 = arith.subf %86, %98 : vector<8x32xf32>
    %100 = vector.broadcast %5 : vector<1x32xf32> to vector<8x32xf32>
    %101 = arith.mulf %100, %99 : vector<8x32xf32>
    %cst_31 = arith.constant 9.99999974E-6 : f32
    %102 = vector.broadcast %cst_31 : f32 to vector<8x1xf32>
    %103 = arith.addf %97, %102 : vector<8x1xf32>
    %104 = math.rsqrt %103 : vector<8x1xf32>
    %105 = vector.broadcast %104 : vector<8x1xf32> to vector<8x32xf32>
    %106 = arith.mulf %101, %105 : vector<8x32xf32>
    %107 = vector.broadcast %6 : vector<1x32xf32> to vector<8x32xf32>
    %108 = arith.addf %106, %107 : vector<8x32xf32>
    %c0_32 = arith.constant 0 : index
    %c0_33 = arith.constant 0 : index
    %109 = vector.load %arg3[%c0_32, %c0_33] : memref<8x32xf32, #tpu.memory_space<vmem>>, vector<8x32xf32>
    tpu.vector_store %arg3[%c0_32, %c0_33], %108 {strides = array<i32>} : memref<8x32xf32, #tpu.memory_space<vmem>>, vector<8x32xf32>,
    return
  }
}

</mosaic_0001>

<llo_original>
// kernel: multi_head_attention.1
$region0: #{multi_head_attention.1}
  #allocation0 [shape = 'u32[]', space=smem, size = 0x4, offset = 0x4, fixed_abs, tag = 'smem constant byte address 0x4 - core index']
  #allocation1 [shape = 'u32[144,128]{1,0:T(1,128)}', space=vmem, size = 0x12000, scoped, tag = 'internal scratch']
  %s0 = inlined_call_operand.vmem [shape: f32[8,96], index: 0, kind: input, shape index: {}]
  %s1 = inlined_call_operand.vmem [shape: f32[128,96], index: 1, kind: input, shape index: {}]
  %s2 = inlined_call_operand.vmem [shape: f32[4,96], index: 2, kind: input, shape index: {}]
  %s3 = inlined_call_operand.hbm [shape: f32[8,32], index: 3, kind: output, shape index: {0}]
  %s4 = inlined_call_operand.vmem [shape: f32[8,32], index: 4, kind: output, shape index: {1}]
  %5 = xla_tuple %s3, %s4
  %s6 = sld [smem:[#allocation0]]
  $region30: #{multi_head_attention.1} parent=0
    _
  %s8 = ssub.s32 1, %s6
  %s9 = scalar_select 0, %s8, %s6
  $region1: #{multi_head_attention.1} parent=0
    #allocation2 [shape = 'u8[4096]{0}', space=vmem, size = 0x1000, scoped, tag = 'output window, operand 0, single buffered']
    #allocation3 [shape = 's32[1]{0}', space=sflag, size = 0x4, scoped, tag = 'scoped memory for multi_head_attention.1']
    %10 = vsyncpa [#allocation3], 0
    // Predicated region
    $region2: #{multi_head_attention.1} parent=1 // pred_check
      _
    $region3: #{multi_head_attention.1} parent=1 // pred_check_branch
      %12 = sbr.rel (0) target = $region5
    $region4: #{multi_head_attention.1} parent=1 // pred_region
      _
    $region5: #{multi_head_attention.1} parent=1 // pred_fallthru
      _
    // Predicated region
    $region6: #{multi_head_attention.1} parent=1 // pred_check
      _
    $region7: #{multi_head_attention.1} parent=1 // pred_check_branch
      %14 = sbr.rel (0) target = $region9
    $region8: #{multi_head_attention.1} parent=1 // pred_region
      _
    $region9: #{multi_head_attention.1} parent=1 // pred_fallthru
      _
    // Predicated region
    $region10: #{multi_head_attention.1} parent=1 // pred_check
      _
    $region11: #{multi_head_attention.1} parent=1 // pred_check_branch
      %16 = sbr.rel (0) target = $region13
    $region12: #{multi_head_attention.1} parent=1 // pred_region
      _
    $region13: #{multi_head_attention.1} parent=1 // pred_fallthru
      _
    %v17 = vld [vmem:[%s0] sm:$0xff]
    %v18 = vld [vmem:[%s1] sm:$0xff]
    %v19 = vld [vmem:[%s1 + $0x8] sm:$0xff]
    %v20 = vld [vmem:[%s1 + $0x10] sm:$0xff]
    %v21 = vld [vmem:[%s1 + $0x18] sm:$0xff]
    %v22 = vld [vmem:[%s1 + $0x20] sm:$0xff]
    %v23 = vld [vmem:[%s1 + $0x28] sm:$0xff]
    %v24 = vld [vmem:[%s1 + $0x30] sm:$0xff]
    %v25 = vld [vmem:[%s1 + $0x38] sm:$0xff]
    %v26 = vld [vmem:[%s1 + $0x40] sm:$0xff]
    %v27 = vld [vmem:[%s1 + $0x48] sm:$0xff]
    %v28 = vld [vmem:[%s1 + $0x50] sm:$0xff]
    %v29 = vld [vmem:[%s1 + $0x58] sm:$0xff]
    %v30 = vld [vmem:[%s1 + $0x60] sm:$0xff]
    %v31 = vld [vmem:[%s1 + $0x68] sm:$0xff]
    %v32 = vld [vmem:[%s1 + $0x70] sm:$0xff]
    %v33 = vld [vmem:[%s1 + $0x78] sm:$0xff]
    %v34 = vld [vmem:[%s2] sm:$0x1]
    %v35 = vld [vmem:[%s2 + $0x1] sm:$0x1]
    %v36 = vld [vmem:[%s2 + $0x2] sm:$0x1]
    %v37 = vld [vmem:[%s2 + $0x3] sm:$0x1]
    %v38 = vlaneseq
    %v39 = vshrl.u32 %v38, 7
    %v40 = vsub.s32 0, %v39
    %v41 = vrot.slane %v34, %v40
    %vm42 = vcmask 785408
    %v44 = vsel %vm42, %v17, 0
    %46 = vmatprep.subr.mxu0 0.0
    %47 = vmatpush1.msra.mxu0 %v18
    %48 = vmatprep.subr.mxu0 0.0
    %49 = vmatpush1.msra.mxu0 %v19
    %50 = vmatprep.subr.mxu0 0.0
    %51 = vmatpush1.msra.mxu0 %v20
    %52 = vmatprep.subr.mxu0 0.0
    %53 = vmatpush1.msra.mxu0 %v21
    %54 = vmatprep.subr.mxu0 0.0
    %55 = vmatpush1.msra.mxu0 %v22
    %56 = vmatprep.subr.mxu0 0.0
    %57 = vmatpush1.msra.mxu0 %v23
    %58 = vmatprep.subr.mxu0 0.0
    %59 = vmatpush1.msra.mxu0 %v24
    %60 = vmatprep.subr.mxu0 0.0
    %61 = vmatpush1.msra.mxu0 %v25
    %62 = vmatprep.subr.mxu0 0.0
    %63 = vmatpush1.msra.mxu0 %v26
    %64 = vmatprep.subr.mxu0 0.0
    %65 = vmatpush1.msra.mxu0 %v27
    %66 = vmatprep.subr.mxu0 0.0
    %67 = vmatpush1.msra.mxu0 %v28
    %68 = vmatprep.subr.mxu0 0.0
    %69 = vmatpush1.msra.mxu0 %v29
    %70 = vmatprep.subr.mxu0 0.0
    %71 = vmatpush1.msra.mxu0 0.0
    %72 = vmatprep.subr.mxu0 0.0
    %73 = vmatpush1.msra.mxu0 0.0
    %74 = vmatprep.subr.mxu0 0.0
    %75 = vmatpush1.msra.mxu0 0.0
    %76 = vmatprep.subr.mxu0 0.0
    %77 = vmatpush1.msra.mxu0 0.0
    %78 = vmatprep.subr.mxu0 0.0
    %79 = vmatpush1.msra.mxu0 0.0
    %80 = vmatprep.subr.mxu0 0.0
    %81 = vmatpush1.msra.mxu0 0.0
    %82 = vmatprep.subr.mxu0 0.0
    %83 = vmatpush1.msra.mxu0 0.0
    %84 = vmatprep.subr.mxu0 0.0
    %85 = vmatpush1.msra.mxu0 0.0
    %86 = vmatprep.subr.mxu0 0.0
    %87 = vmatpush1.msra.mxu0 0.0
    %88 = vmatprep.subr.mxu0 0.0
    %89 = vmatpush1.msra.mxu0 0.0
    %90 = vmatprep.subr.mxu0 0.0
    %91 = vmatpush1.msra.mxu0 0.0
    %92 = vmatprep.subr.mxu0 0.0
    %93 = vmatpush1.msra.mxu0 0.0
    %94 = vmatprep.subr.mxu0 0.0
    %95 = vmatpush1.msra.mxu0 0.0
    %96 = vmatprep.subr.mxu0 0.0
    %97 = vmatpush1.msra.mxu0 0.0
    %98 = vmatprep.subr.mxu0 0.0
    %99 = vmatpush1.msra.mxu0 0.0
    %100 = vmatprep.subr.mxu0 0.0
    %101 = vmatpush1.msra.mxu0 0.0
    %102 = vmatprep.subr.mxu0 0.0
    %103 = vmatpush1.msra.mxu0 0.0
    %104 = vmatprep.subr.mxu0 0.0
    %105 = vmatpush1.msra.mxu0 0.0
    %106 = vmatprep.subr.mxu0 0.0
    %107 = vmatpush1.msra.mxu0 0.0
    %108 = vmatprep.subr.mxu0 0.0
    %109 = vmatpush1.msra.mxu0 0.0
    %110 = vmatprep.mubr.f32.mxu0 0.0
    %111 = vmatmul.mubr.f32.gmra.mrb[0].mxu0 %v44
    %v112 = vpop.f32.mrb[0].mxu0
    %v113 = vadd.f32 %v41, %v112
    %v114 = vpop.f32.mrb[0].mxu0
    %115 = vdwg.mxu0
    %116 = vxpose.xlu0.b32.start [1/16] %v113, 128
    %117 = vxpose.xlu0.b32.cont [2/16] 0.0, 128
    %118 = vxpose.xlu0.b32.cont [3/16] 0.0, 128
    %119 = vxpose.xlu0.b32.cont [4/16] 0.0, 128
    %120 = vxpose.xlu0.b32.cont [5/16] 0.0, 128
    %121 = vxpose.xlu0.b32.cont [6/16] 0.0, 128
    %122 = vxpose.xlu0.b32.cont [7/16] 0.0, 128
    %123 = vxpose.xlu0.b32.cont [8/16] 0.0, 128
    %124 = vxpose.xlu0.b32.cont [9/16] 0.0, 128
    %125 = vxpose.xlu0.b32.cont [10/16] 0.0, 128
    %126 = vxpose.xlu0.b32.cont [11/16] 0.0, 128
    %127 = vxpose.xlu0.b32.cont [12/16] 0.0, 128
    %128 = vxpose.xlu0.b32.cont [13/16] 0.0, 128
    %129 = vxpose.xlu0.b32.cont [14/16] 0.0, 128
    %130 = vxpose.xlu0.b32.cont [15/16] 0.0, 128
    %131 = vxpose.xlu0.b32.end [16/16] 0.0, 128
    %v132 = vpop.trf.xlu0
    %v133 = vpop.trf.xlu0
    %v134 = vpop.trf.xlu0
    %v135 = vpop.trf.xlu0
    %v136 = vpop.trf.xlu0
    %v137 = vpop.trf.xlu0
    %v138 = vpop.trf.xlu0
    %v139 = vpop.trf.xlu0
    %v140 = vpop.trf.xlu0
    %v141 = vpop.trf.xlu0
    %v142 = vpop.trf.xlu0
    %v143 = vpop.trf.xlu0
    %v144 = vpop.trf.xlu0
    %v145 = vpop.trf.xlu0
    %v146 = vpop.trf.xlu0
    %v147 = vpop.trf.xlu0
    %152 = vrot.lane.b32.xlu0 %v132, 8
    %v153 = vpop.permute.xlu0 %152
    %154 = vrot.lane.b32.xlu0 %v133, 8
    %v155 = vpop.permute.xlu0 %154
    %156 = vrot.lane.b32.xlu0 %v134, 8
    %v157 = vpop.permute.xlu0 %156
    %158 = vrot.lane.b32.xlu0 %v135, 8
    %v159 = vpop.permute.xlu0 %158
    %164 = vrot.lane.b32.xlu0 %v132, 16
    %v165 = vpop.permute.xlu0 %164
    %166 = vrot.lane.b32.xlu0 %v133, 16
    %v167 = vpop.permute.xlu0 %166
    %168 = vrot.lane.b32.xlu0 %v134, 16
    %v169 = vpop.permute.xlu0 %168
    %170 = vrot.lane.b32.xlu0 %v135, 16
    %v171 = vpop.permute.xlu0 %170
    %176 = vrot.lane.b32.xlu0 %v132, 24
    %v177 = vpop.permute.xlu0 %176
    %178 = vrot.lane.b32.xlu0 %v133, 24
    %v179 = vpop.permute.xlu0 %178
    %180 = vrot.lane.b32.xlu0 %v134, 24
    %v181 = vpop.permute.xlu0 %180
    %182 = vrot.lane.b32.xlu0 %v135, 24
    %v183 = vpop.permute.xlu0 %182
    %vm188 = vcmask 64512
    %v189 = vsel %vm188, %v132, %v153
    %v190 = vsel %vm188, %v133, %v155
    %v191 = vsel %vm188, %v134, %v157
    %v192 = vsel %vm188, %v135, %v159
    %vm193 = vcmask 130048
    %v194 = vsel %vm193, %v189, %v165
    %v195 = vsel %vm193, %v190, %v167
    %v196 = vsel %vm193, %v191, %v169
    %v197 = vsel %vm193, %v192, %v171
    %vm198 = vcmask 195584
    %v199 = vsel %vm198, %v194, %v177
    %v200 = vsel %vm198, %v195, %v179
    %v201 = vsel %vm198, %v196, %v181
    %v202 = vsel %vm198, %v197, %v183
    %v203 = vlaneseq
    %v204 = vshrl.u32 %v203, 7
    %v205 = vadd.s32 %v204, 8
    %v206 = vadd.s32 %v204, 16
    %v207 = vadd.s32 %v204, 24
    %v208 = vlaneseq
    %v209 = vand.u32 %v208, 127
    %v210 = vshra.s32 %v204, 3
    %v211 = vshra.s32 %v205, 3
    %v212 = vshra.s32 %v206, 3
    %v213 = vshra.s32 %v207, 3
    %v214 = vshra.s32 %v209, 3
    %vm215 = vcmp.eq.s32.totalorder %v210, %v214
    %vm216 = vcmp.eq.s32.totalorder %v211, %v214
    %vm217 = vcmp.eq.s32.totalorder %v212, %v214
    %vm218 = vcmp.eq.s32.totalorder %v213, %v214
    %v219 = vsel %vm215, %v199, 0.0
    %v220 = vsel %vm216, %v200, 0.0
    %v221 = vsel %vm217, %v201, 0.0
    %v222 = vsel %vm218, %v202, 0.0
    %224 = vrot.lane.b32.xlu0 %v113, 64
    %v225 = vpop.permute.xlu0 %224
    %vm226 = vcmask 261120
    %v227 = vsel %vm226, %v225, 0
    %229 = vmatprep.subr.mxu0 0.0
    %230 = vmatpush1.msra.mxu0 %v219
    %231 = vmatprep.subr.mxu0 0.0
    %232 = vmatpush1.msra.mxu0 %v220
    %233 = vmatprep.subr.mxu0 0.0
    %234 = vmatpush1.msra.mxu0 %v221
    %235 = vmatprep.subr.mxu0 0.0
    %236 = vmatpush1.msra.mxu0 %v222
    %237 = vmatprep.subr.mxu0 0.0
    %238 = vmatpush1.msra.mxu0 0.0
    %239 = vmatprep.subr.mxu0 0.0
    %240 = vmatpush1.msra.mxu0 0.0
    %241 = vmatprep.subr.mxu0 0.0
    %242 = vmatpush1.msra.mxu0 0.0
    %243 = vmatprep.subr.mxu0 0.0
    %244 = vmatpush1.msra.mxu0 0.0
    %245 = vmatprep.subr.mxu0 0.0
    %246 = vmatpush1.msra.mxu0 0.0
    %247 = vmatprep.subr.mxu0 0.0
    %248 = vmatpush1.msra.mxu0 0.0
    %249 = vmatprep.subr.mxu0 0.0
    %250 = vmatpush1.msra.mxu0 0.0
    %251 = vmatprep.subr.mxu0 0.0
    %252 = vmatpush1.msra.mxu0 0.0
    %253 = vmatprep.subr.mxu0 0.0
    %254 = vmatpush1.msra.mxu0 0.0
    %255 = vmatprep.subr.mxu0 0.0
    %256 = vmatpush1.msra.mxu0 0.0
    %257 = vmatprep.subr.mxu0 0.0
    %258 = vmatpush1.msra.mxu0 0.0
    %259 = vmatprep.subr.mxu0 0.0
    %260 = vmatpush1.msra.mxu0 0.0
    %261 = vmatprep.subr.mxu0 0.0
    %262 = vmatpush1.msra.mxu0 0.0
    %263 = vmatprep.subr.mxu0 0.0
    %264 = vmatpush1.msra.mxu0 0.0
    %265 = vmatprep.subr.mxu0 0.0
    %266 = vmatpush1.msra.mxu0 0.0
    %267 = vmatprep.subr.mxu0 0.0
    %268 = vmatpush1.msra.mxu0 0.0
    %269 = vmatprep.subr.mxu0 0.0
    %270 = vmatpush1.msra.mxu0 0.0
    %271 = vmatprep.subr.mxu0 0.0
    %272 = vmatpush1.msra.mxu0 0.0
    %273 = vmatprep.subr.mxu0 0.0
    %274 = vmatpush1.msra.mxu0 0.0
    %275 = vmatprep.subr.mxu0 0.0
    %276 = vmatpush1.msra.mxu0 0.0
    %277 = vmatprep.subr.mxu0 0.0
    %278 = vmatpush1.msra.mxu0 0.0
    %279 = vmatprep.subr.mxu0 0.0
    %280 = vmatpush1.msra.mxu0 0.0
    %281 = vmatprep.subr.mxu0 0.0
    %282 = vmatpush1.msra.mxu0 0.0
    %283 = vmatprep.subr.mxu0 0.0
    %284 = vmatpush1.msra.mxu0 0.0
    %285 = vmatprep.subr.mxu0 0.0
    %286 = vmatpush1.msra.mxu0 0.0
    %287 = vmatprep.subr.mxu0 0.0
    %288 = vmatpush1.msra.mxu0 0.0
    %289 = vmatprep.subr.mxu0 0.0
    %290 = vmatpush1.msra.mxu0 0.0
    %291 = vmatprep.subr.mxu0 0.0
    %292 = vmatpush1.msra.mxu0 0.0
    %293 = vmatprep.mubr.f32.mxu0 0.0
    %294 = vmatmul.mubr.f32.gmra.mrb[0].mxu0 %v227
    %v295 = vpop.f32.mrb[0].mxu0
    %v296 = vadd.f32 0.0, %v295
    %v297 = vpop.f32.mrb[0].mxu0
    %298 = vdwg.mxu0
    %v299 = vsel %vm188, %v296, -inf
    %300 = vmax.xlane.f32.xlu0 %v299
    %v301 = vpop.xlane.xlu0 %300
    %v302 = vsub.f32 %v296, %v301
    %v303 = vmul.f32 %v302, 1.442695
    %v304 = vpow.pop %v303
    %v305 = vsel %vm188, %v304, 0.0
    %306 = vadd.xlane.f32.xlu0 %v305
    %v307 = vpop.xlane.xlu0 %306
    %v308 = vrcp.pop %v307
    %v309 = vmul.f32 %v304, %v308
    %vm310 = vcmask 130112
    %v311 = vsel %vm310, %v296, -inf
    %312 = vmax.xlane.f32.xlu0 %v311
    %v313 = vpop.xlane.xlu0 %312
    %v314 = vsub.f32 %v296, %v313
    %v315 = vmul.f32 %v314, 1.442695
    %v316 = vpow.pop %v315
    %318 = vrot.lane.b32.xlu0 %v316, 120
    %v319 = vpop.permute.xlu0 %318
    %v321 = vsel %vm188, %v319, 0.0
    %322 = vadd.xlane.f32.xlu0 %v321
    %v323 = vpop.xlane.xlu0 %322
    %v324 = vrcp.pop %v323
    %v325 = vmul.f32 %v316, %v324
    %vm326 = vcmask 195712
    %v327 = vsel %vm326, %v296, -inf
    %328 = vmax.xlane.f32.xlu0 %v327
    %v329 = vpop.xlane.xlu0 %328
    %v330 = vsub.f32 %v296, %v329
    %v331 = vmul.f32 %v330, 1.442695
    %v332 = vpow.pop %v331
    %334 = vrot.lane.b32.xlu0 %v332, 112
    %v335 = vpop.permute.xlu0 %334
    %v337 = vsel %vm188, %v335, 0.0
    %338 = vadd.xlane.f32.xlu0 %v337
    %v339 = vpop.xlane.xlu0 %338
    %v340 = vrcp.pop %v339
    %v341 = vmul.f32 %v332, %v340
    %vm342 = vcmask 261312
    %v343 = vsel %vm342, %v296, -inf
    %344 = vmax.xlane.f32.xlu0 %v343
    %v345 = vpop.xlane.xlu0 %344
    %v346 = vsub.f32 %v296, %v345
    %v347 = vmul.f32 %v346, 1.442695
    %v348 = vpow.pop %v347
    %350 = vrot.lane.b32.xlu0 %v348, 104
    %v351 = vpop.permute.xlu0 %350
    %v353 = vsel %vm188, %v351, 0.0
    %354 = vadd.xlane.f32.xlu0 %v353
    %v355 = vpop.xlane.xlu0 %354
    %v356 = vrcp.pop %v355
    %v357 = vmul.f32 %v348, %v356
    %v358 = vsel %vm188, %v309, %v325
    %v359 = vsel %vm193, %v358, %v341
    %v360 = vsel %vm198, %v359, %v357
    %361 = vst.msk [vmem:[%s4] sm:$0xff] %vm226, %v360
    %362 = vrot.lane.b32.xlu0 %v113, 96
    %v363 = vpop.permute.xlu0 %362
    %v365 = vsel %vm215, %v363, 0.0
    %v366 = vsel %vm216, %v363, 0.0
    %v367 = vsel %vm217, %v363, 0.0
    %v368 = vsel %vm218, %v363, 0.0
    %v370 = vsel %vm226, %v360, 0
    %372 = vmatprep.subr.mxu0 0.0
    %373 = vmatpush1.msra.mxu0 %v365
    %374 = vmatprep.subr.mxu0 0.0
    %375 = vmatpush1.msra.mxu0 %v366
    %376 = vmatprep.subr.mxu0 0.0
    %377 = vmatpush1.msra.mxu0 %v367
    %378 = vmatprep.subr.mxu0 0.0
    %379 = vmatpush1.msra.mxu0 %v368
    %380 = vmatprep.subr.mxu0 0.0
    %381 = vmatpush1.msra.mxu0 0.0
    %382 = vmatprep.subr.mxu0 0.0
    %383 = vmatpush1.msra.mxu0 0.0
    %384 = vmatprep.subr.mxu0 0.0
    %385 = vmatpush1.msra.mxu0 0.0
    %386 = vmatprep.subr.mxu0 0.0
    %387 = vmatpush1.msra.mxu0 0.0
    %388 = vmatprep.subr.mxu0 0.0
    %389 = vmatpush1.msra.mxu0 0.0
    %390 = vmatprep.subr.mxu0 0.0
    %391 = vmatpush1.msra.mxu0 0.0
    %392 = vmatprep.subr.mxu0 0.0
    %393 = vmatpush1.msra.mxu0 0.0
    %394 = vmatprep.subr.mxu0 0.0
    %395 = vmatpush1.msra.mxu0 0.0
    %396 = vmatprep.subr.mxu0 0.0
    %397 = vmatpush1.msra.mxu0 0.0
    %398 = vmatprep.subr.mxu0 0.0
    %399 = vmatpush1.msra.mxu0 0.0
    %400 = vmatprep.subr.mxu0 0.0
    %401 = vmatpush1.msra.mxu0 0.0
    %402 = vmatprep.subr.mxu0 0.0
    %403 = vmatpush1.msra.mxu0 0.0
    %404 = vmatprep.subr.mxu0 0.0
    %405 = vmatpush1.msra.mxu0 0.0
    %406 = vmatprep.subr.mxu0 0.0
    %407 = vmatpush1.msra.mxu0 0.0
    %408 = vmatprep.subr.mxu0 0.0
    %409 = vmatpush1.msra.mxu0 0.0
    %410 = vmatprep.subr.mxu0 0.0
    %411 = vmatpush1.msra.mxu0 0.0
    %412 = vmatprep.subr.mxu0 0.0
    %413 = vmatpush1.msra.mxu0 0.0
    %414 = vmatprep.subr.mxu0 0.0
    %415 = vmatpush1.msra.mxu0 0.0
    %416 = vmatprep.subr.mxu0 0.0
    %417 = vmatpush1.msra.mxu0 0.0
    %418 = vmatprep.subr.mxu0 0.0
    %419 = vmatpush1.msra.mxu0 0.0
    %420 = vmatprep.subr.mxu0 0.0
    %421 = vmatpush1.msra.mxu0 0.0
    %422 = vmatprep.subr.mxu0 0.0
    %423 = vmatpush1.msra.mxu0 0.0
    %424 = vmatprep.subr.mxu0 0.0
    %425 = vmatpush1.msra.mxu0 0.0
    %426 = vmatprep.subr.mxu0 0.0
    %427 = vmatpush1.msra.mxu0 0.0
    %428 = vmatprep.subr.mxu0 0.0
    %429 = vmatpush1.msra.mxu0 0.0
    %430 = vmatprep.subr.mxu0 0.0
    %431 = vmatpush1.msra.mxu0 0.0
    %432 = vmatprep.subr.mxu0 0.0
    %433 = vmatpush1.msra.mxu0 0.0
    %434 = vmatprep.subr.mxu0 0.0
    %435 = vmatpush1.msra.mxu0 0.0
    %436 = vmatprep.mubr.f32.mxu0 0.0
    %437 = vmatmul.mubr.f32.gmra.mrb[0].mxu0 %v370
    %v438 = vpop.f32.mrb[0].mxu0
    %v439 = vadd.f32 0.0, %v438
    %v440 = vpop.f32.mrb[0].mxu0
    %441 = vdwg.mxu0
    %v442 = vlaneseq
    %v443 = vshrl.u32 %v442, 7
    %v444 = vsub.s32 0, %v443
    %v445 = vrot.slane %v35, %v444
    %v447 = vsel %vm226, %v439, 0
    %449 = vmatprep.subr.mxu0 0.0
    %450 = vmatpush1.msra.mxu0 %v30
    %451 = vmatprep.subr.mxu0 0.0
    %452 = vmatpush1.msra.mxu0 %v31
    %453 = vmatprep.subr.mxu0 0.0
    %454 = vmatpush1.msra.mxu0 %v32
    %455 = vmatprep.subr.mxu0 0.0
    %456 = vmatpush1.msra.mxu0 %v33
    %457 = vmatprep.subr.mxu0 0.0
    %458 = vmatpush1.msra.mxu0 0.0
    %459 = vmatprep.subr.mxu0 0.0
    %460 = vmatpush1.msra.mxu0 0.0
    %461 = vmatprep.subr.mxu0 0.0
    %462 = vmatpush1.msra.mxu0 0.0
    %463 = vmatprep.subr.mxu0 0.0
    %464 = vmatpush1.msra.mxu0 0.0
    %465 = vmatprep.subr.mxu0 0.0
    %466 = vmatpush1.msra.mxu0 0.0
    %467 = vmatprep.subr.mxu0 0.0
    %468 = vmatpush1.msra.mxu0 0.0
    %469 = vmatprep.subr.mxu0 0.0
    %470 = vmatpush1.msra.mxu0 0.0
    %471 = vmatprep.subr.mxu0 0.0
    %472 = vmatpush1.msra.mxu0 0.0
    %473 = vmatprep.subr.mxu0 0.0
    %474 = vmatpush1.msra.mxu0 0.0
    %475 = vmatprep.subr.mxu0 0.0
    %476 = vmatpush1.msra.mxu0 0.0
    %477 = vmatprep.subr.mxu0 0.0
    %478 = vmatpush1.msra.mxu0 0.0
    %479 = vmatprep.subr.mxu0 0.0
    %480 = vmatpush1.msra.mxu0 0.0
    %481 = vmatprep.subr.mxu0 0.0
    %482 = vmatpush1.msra.mxu0 0.0
    %483 = vmatprep.subr.mxu0 0.0
    %484 = vmatpush1.msra.mxu0 0.0
    %485 = vmatprep.subr.mxu0 0.0
    %486 = vmatpush1.msra.mxu0 0.0
    %487 = vmatprep.subr.mxu0 0.0
    %488 = vmatpush1.msra.mxu0 0.0
    %489 = vmatprep.subr.mxu0 0.0
    %490 = vmatpush1.msra.mxu0 0.0
    %491 = vmatprep.subr.mxu0 0.0
    %492 = vmatpush1.msra.mxu0 0.0
    %493 = vmatprep.subr.mxu0 0.0
    %494 = vmatpush1.msra.mxu0 0.0
    %495 = vmatprep.subr.mxu0 0.0
    %496 = vmatpush1.msra.mxu0 0.0
    %497 = vmatprep.subr.mxu0 0.0
    %498 = vmatpush1.msra.mxu0 0.0
    %499 = vmatprep.subr.mxu0 0.0
    %500 = vmatpush1.msra.mxu0 0.0
    %501 = vmatprep.subr.mxu0 0.0
    %502 = vmatpush1.msra.mxu0 0.0
    %503 = vmatprep.subr.mxu0 0.0
    %504 = vmatpush1.msra.mxu0 0.0
    %505 = vmatprep.subr.mxu0 0.0
    %506 = vmatpush1.msra.mxu0 0.0
    %507 = vmatprep.subr.mxu0 0.0
    %508 = vmatpush1.msra.mxu0 0.0
    %509 = vmatprep.subr.mxu0 0.0
    %510 = vmatpush1.msra.mxu0 0.0
    %511 = vmatprep.subr.mxu0 0.0
    %512 = vmatpush1.msra.mxu0 0.0
    %513 = vmatprep.mubr.f32.mxu0 0.0
    %514 = vmatmul.mubr.f32.gmra.mrb[0].mxu0 %v447
    %v515 = vpop.f32.mrb[0].mxu0
    %v516 = vadd.f32 %v445, %v515
    %v517 = vpop.f32.mrb[0].mxu0
    %518 = vdwg.mxu0
    %520 = vrot.lane.b32.xlu0 %v516, 64
    %v521 = vpop.permute.xlu0 %520
    %v523 = vadd.f32 %v17, %v521
    %525 = vrot.lane.b32.xlu0 %v523, 64
    %v526 = vpop.permute.xlu0 %525
    %v528 = vsel %vm226, %v526, 0.0
    %529 = vadd.xlane.f32.xlu0 %v528
    %v530 = vpop.xlane.xlu0 %529
    %v531 = vrcp.pop 32.0
    %v532 = vmul.f32 %v530, %v531
    %v533 = vsub.f32 %v523, %v532
    %v534 = vmul.f32 %v533, %v533
    %536 = vrot.lane.b32.xlu0 %v534, 64
    %v537 = vpop.permute.xlu0 %536
    %v539 = vsel %vm226, %v537, 0.0
    %540 = vadd.xlane.f32.xlu0 %v539
    %v541 = vpop.xlane.xlu0 %540
    %v542 = vmul.f32 %v541, %v531
    %v543 = vlaneseq
    %v544 = vshrl.u32 %v543, 7
    %v545 = vsub.s32 0, %v544
    %v546 = vrot.slane %v36, %v545
    %548 = vrot.lane.b32.xlu0 %v533, 64
    %v549 = vpop.permute.xlu0 %548
    %v551 = vmul.f32 %v546, %v549
    %v552 = vadd.f32 %v542, 1e-05
    %v553 = vrsqrt.pop %v552
    %v554 = vmul.f32 %v551, %v553
    %v555 = vlaneseq
    %v556 = vshrl.u32 %v555, 7
    %v557 = vsub.s32 0, %v556
    %v558 = vrot.slane %v37, %v557
    %v559 = vadd.f32 %v554, %v558
    %560 = vst.msk [vmem:[#allocation2] sm:$0xff] %vm226, %v559
    // Predicated region
    $region14: #{multi_head_attention.1} parent=1 // pred_check
      _
    $region15: #{multi_head_attention.1} parent=1 // pred_check_branch
      %562 = sbr.rel (0) target = $region17
    $region16: #{multi_head_attention.1} parent=1 // pred_region
      %s564 = ssub.s32 128, 128
      %565 = vsyncadd [#allocation3], %s564
      %s567 = sshll.u32 [#allocation2], 4
      %s568 = int_to_ptr.vmem [resolvable:$true] %s567
      %570 = dma.vmem_to_hbm [thread:$0]  %s568, 128, %s3, [#allocation3]
    $region17: #{multi_head_attention.1} parent=1 // pred_fallthru
      _
    // Predicated region
    $region18: #{multi_head_attention.1} parent=1 // pred_check
      _
    $region19: #{multi_head_attention.1} parent=1 // pred_check_branch
      %572 = sbr.rel (0) target = $region21
    $region20: #{multi_head_attention.1} parent=1 // pred_region
      _
    $region21: #{multi_head_attention.1} parent=1 // pred_fallthru
      _
    // Predicated region
    $region22: #{multi_head_attention.1} parent=1 // pred_check
      _
    $region23: #{multi_head_attention.1} parent=1 // pred_check_branch
      %574 = sbr.rel (0) target = $region25
    $region24: #{multi_head_attention.1} parent=1 // pred_region
      %575 = dma.done [#allocation3], 128
    $region25: #{multi_head_attention.1} parent=1 // pred_fallthru
      _
    // Predicated region
    $region26: #{multi_head_attention.1} parent=1 // pred_check
      _
    $region27: #{multi_head_attention.1} parent=1 // pred_check_branch
      %577 = sbr.rel (0) target = $region29
    $region28: #{multi_head_attention.1} parent=1 // pred_region
      _
    $region29: #{multi_head_attention.1} parent=1 // pred_fallthru
      _
    %578 = vsyncpa [#allocation3], 1

</llo_original>
